<compile_context>
chip_gen: v6e
topology: v6e:2x2x1
jax: 0.10.0
libtpu: 0.0.40
codegen_flags: <defaults>
</compile_context>

<pallas_src>
import functools

import jax
import jax.numpy as jnp
from jax.experimental import pallas as pl
from jax.experimental.pallas import tpu as pltpu


def _gap_kernel(x_ref, o_ref, acc_ref, *, inv_hw):
    # x_ref:   (Bn, C_tile, HW_tile)  current spatial slab
    # o_ref:   (Bn, C_tile)           output block (resident across k)
    # acc_ref: (Bn, C_tile) f32       running spatial sum
    k = pl.program_id(2)

    @pl.when(k == 0)
    def _init():
        acc_ref[...] = jnp.zeros_like(acc_ref)

    # Widen to f32 inside the reduction (no explicit upcast copy of the tile).
    acc_ref[...] += jnp.sum(x_ref[...], axis=-1, dtype=jnp.float32)

    @pl.when(k == pl.num_programs(2) - 1)
    def _finalize():
        o_ref[...] = (acc_ref[...] * inv_hw).astype(o_ref.dtype)


def _pick_bn(n):
    """Batch rows per grid step. Output block's 2nd-to-last dim must be a
    multiple of 8 or the full batch extent."""
    if n % 8 == 0:
        return 8, n
    if n <= 32:
        return n, n                      # whole (small) batch per step
    n_pad = ((n + 7) // 8) * 8           # pad batch with zero rows, slice later
    return 8, n_pad


def _pick_c_tile(c):
    """Channel tile: full C unless C is a large multiple of 128 (then split so
    blocks stay modest and dual-TC chips get >=2 parallel steps)."""
    if c % 128 == 0 and c > 128:
        m = c // 128
        best = 1
        for d in range(1, m + 1):
            if m % d == 0 and d * 128 <= 512:
                best = max(best, d)
        return best * 128
    return c


def _pick_hw_tile(hw, per_lane_bytes, max_block_bytes, max_lanes=4096):
    """Lane-dense spatial tile (multiple of 128) sized against a VMEM budget.
    Returns (hw_tile, hw_pad)."""
    budget_lanes = max(128, max_block_bytes // max(per_lane_bytes, 1))
    budget_lanes = min(budget_lanes, max_lanes)
    if hw % 128 == 0:
        # Largest multiple-of-128 divisor of HW within the budget (no padding).
        m = hw // 128
        best = 1
        d = 1
        while d * d <= m:
            if m % d == 0:
                for cand in (d, m // d):
                    if cand * 128 <= budget_lanes and cand > best:
                        best = cand
            d += 1
        return best * 128, hw
    if hw <= budget_lanes:
        return hw, hw                    # full-extent block, no padding needed
    # Large, ragged HW: pad with zeros to a multiple of the tile.
    hw_tile = max(128, (budget_lanes // 128) * 128)
    hw_pad = ((hw + hw_tile - 1) // hw_tile) * hw_tile
    return hw_tile, hw_pad


def global_avg_pool2d(x, *, max_block_bytes=4 * 1024 * 1024):
    """x: (N, C, H, W) -> (N, C), mean over H and W (matches GlobalAvgPool2d)."""
    N, C, H, W = x.shape
    HW = H * W
    itemsize = jnp.dtype(x.dtype).itemsize

    bn, n_pad = _pick_bn(N)
    c_tile = _pick_c_tile(C)
    hw_tile, hw_pad = _pick_hw_tile(HW, bn * c_tile * itemsize, max_block_bytes)

    xf = x.reshape(N, C, HW)             # free for contiguous NCHW
    if n_pad != N or hw_pad != HW:
        # Zero padding is harmless: we divide by the true H*W and slice rows off.
        xf = jnp.pad(xf, ((0, n_pad - N), (0, 0), (0, hw_pad - HW)))

    grid = (n_pad // bn, C // c_tile, hw_pad // hw_tile)
    kernel = functools.partial(_gap_kernel, inv_hw=1.0 / float(HW))

    out = pl.pallas_call(
        kernel,
        out_shape=jax.ShapeDtypeStruct((n_pad, C), x.dtype),
        grid_spec=pltpu.PrefetchScalarGridSpec(
            num_scalar_prefetch=0,
            grid=grid,
            in_specs=[
                pl.BlockSpec((bn, c_tile, hw_tile), lambda n, c, k: (n, c, k)),
            ],
            out_specs=pl.BlockSpec((bn, c_tile), lambda n, c, k: (n, c)),
            scratch_shapes=[pltpu.VMEM((bn, c_tile), jnp.float32)],
        ),
        compiler_params=pltpu.CompilerParams(
            dimension_semantics=("parallel", "parallel", "arbitrary"),
        ),
    )(xf)

    return out[:N] if n_pad != N else out


if __name__ == "__main__":
    key = jax.random.PRNGKey(0)
    N, C, H, W = 2, 4, 16, 16
    x = jax.random.normal(key, (N, C, H, W), dtype=jnp.float32)

    out = global_avg_pool2d(x)
    out = jax.block_until_ready(out)

    # reference check (pure JAX)
    ref = jnp.mean(x, axis=(2, 3))
    assert out.shape == (N, C), out.shape
    assert jnp.allclose(out, ref, atol=1e-5, rtol=1e-5), "mismatch vs reference"

    print("KERNEL_OK")
</pallas_src>

<mosaic_0001>
module attributes {stable_mosaic.version = 11 : i64} {
  func.func @_gap_kernel(%arg0: i32, %arg1: i32, %arg2: i32, %arg3: memref<2x4x256xf32, #tpu.memory_space<vmem>>, %arg4: memref<2x4xf32, #tpu.memory_space<vmem>>, %arg5: memref<2x4xf32, #tpu.memory_space<vmem>>) attributes {dimension_semantics = [#tpu.dimension_semantics<parallel>, #tpu.dimension_semantics<parallel>, #tpu.dimension_semantics<arbitrary>], iteration_bounds = array<i64: 1, 1, 1>, scalar_prefetch = 0 : i64, scratch_operands = 1 : i64, tpu.core_type = #tpu.core_type<tc>, window_params = [{transform_indices = @transform_0, window_bounds = array<i64: 2, 4, 256>}, {transform_indices = @transform_1, window_bounds = array<i64: 2, 4>}]} {
    %c0_i32 = arith.constant 0 : i32
    %0 = arith.cmpi eq, %arg2, %c0_i32 : i32
    %1 = arith.extui %0 : i1 to i32
    %c0_i32_0 = arith.constant 0 : i32
    %2 = arith.cmpi ne, %1, %c0_i32_0 : i32
    scf.if %2 {
      %cst_9 = arith.constant 0.000000e+00 : f32
      %11 = vector.broadcast %cst_9 : f32 to vector<2x4xf32>
      %c0_10 = arith.constant 0 : index
      %c0_11 = arith.constant 0 : index
      %12 = vector.load %arg5[%c0_10, %c0_11] : memref<2x4xf32, #tpu.memory_space<vmem>>, vector<2x4xf32>
      tpu.vector_store %arg5[%c0_10, %c0_11], %11 {strides = array<i32>} : memref<2x4xf32, #tpu.memory_space<vmem>>, vector<2x4xf32>,
    } else {
    }
    %c0 = arith.constant 0 : index
    %c0_1 = arith.constant 0 : index
    %3 = vector.load %arg5[%c0, %c0_1] : memref<2x4xf32, #tpu.memory_space<vmem>>, vector<2x4xf32>
    %c0_2 = arith.constant 0 : index
    %c0_3 = arith.constant 0 : index
    %c0_4 = arith.constant 0 : index
    %4 = vector.load %arg3[%c0_2, %c0_3, %c0_4] : memref<2x4x256xf32, #tpu.memory_space<vmem>>, vector<2x4x256xf32>
    %cst = arith.constant dense<0.000000e+00> : vector<2x4xf32>
    %5 = vector.multi_reduction <add>, %4, %cst [2] : vector<2x4x256xf32> to vector<2x4xf32>
    %6 = arith.addf %3, %5 : vector<2x4xf32>
    %c0_5 = arith.constant 0 : index
    %c0_6 = arith.constant 0 : index
    %7 = vector.load %arg5[%c0_5, %c0_6] : memref<2x4xf32, #tpu.memory_space<vmem>>, vector<2x4xf32>
    tpu.vector_store %arg5[%c0_5, %c0_6], %6 {strides = array<i32>} : memref<2x4xf32, #tpu.memory_space<vmem>>, vector<2x4xf32>,
    %c0_i32_7 = arith.constant 0 : i32
    %8 = arith.cmpi eq, %arg2, %c0_i32_7 : i32
    %9 = arith.extui %8 : i1 to i32
    %c0_i32_8 = arith.constant 0 : i32
    %10 = arith.cmpi ne, %9, %c0_i32_8 : i32
    scf.if %10 {
      %c0_9 = arith.constant 0 : index
      %c0_10 = arith.constant 0 : index
      %11 = vector.load %arg5[%c0_9, %c0_10] : memref<2x4xf32, #tpu.memory_space<vmem>>, vector<2x4xf32>
      %cst_11 = arith.constant 3.906250e-03 : f32
      %12 = vector.broadcast %cst_11 : f32 to vector<2x4xf32>
      %13 = arith.mulf %11, %12 : vector<2x4xf32>
      %c0_12 = arith.constant 0 : index
      %c0_13 = arith.constant 0 : index
      %14 = vector.load %arg4[%c0_12, %c0_13] : memref<2x4xf32, #tpu.memory_space<vmem>>, vector<2x4xf32>
      tpu.vector_store %arg4[%c0_12, %c0_13], %13 {strides = array<i32>} : memref<2x4xf32, #tpu.memory_space<vmem>>, vector<2x4xf32>,
    } else {
    }
    return
  }
  func.func @transform_0(%arg0: i32, %arg1: i32, %arg2: i32) -> (i32, i32, i32) {
    %c0_i32 = arith.constant 0 : i32
    return %arg0, %arg1, %arg2 : i32, i32, i32
  }
  func.func @transform_1(%arg0: i32, %arg1: i32, %arg2: i32) -> (i32, i32) {
    %c0_i32 = arith.constant 0 : i32
    return %arg0, %arg1 : i32, i32
  }
}

</mosaic_0001>

<llo_original>
// kernel: tpu_custom_call.1
$region0: #{tpu_custom_call.1}
  #allocation0 [shape = 'u32[]', space=smem, size = 0x4, offset = 0x4, fixed_abs, tag = 'smem constant byte address 0x4 - core index']
  #allocation1 [shape = 'u32[144,128]{1,0:T(1,128)}', space=vmem, size = 0x12000, scoped, tag = 'internal scratch']
  #allocation2 [shape = 'f32[2,4]{1,0:T(2,128)}', space=vmem, size = 0x400, scoped, tag = 'scratch operand']
  %s0 = inlined_call_operand.hbm [shape: f32[2,4,256], index: 0, kind: input, shape index: {}]
  %s1 = inlined_call_operand.hbm [shape: f32[2,4], index: 1, kind: output, shape index: {}]
  %s2 = sld [smem:[#allocation0]]
  $region26: #{tpu_custom_call.1} parent=0
    _
  %s4 = ssub.s32 1, %s2
  %s5 = scalar_select 0, %s4, %s2
  $region1: #{tpu_custom_call.1} parent=0
    #allocation3 [shape = 'u8[8192]{0}', space=vmem, size = 0x2000, scoped, tag = 'input window, operand 0, single buffered']
    #allocation4 [shape = 's32[1]{0}', space=sflag, size = 0x4, scoped, tag = 'scoped memory for tpu_custom_call.1']
    #allocation5 [shape = 's32[1]{0}', space=sflag, size = 0x4, scoped, tag = 'scoped memory for tpu_custom_call.1']
    #allocation6 [shape = 'u8[1024]{0}', space=vmem, size = 0x400, scoped, tag = 'output window, operand 0, single buffered']
    %6 = vsyncpa [#allocation4], 0
    %7 = vsyncpa [#allocation5], 0
    // Predicated region
    $region2: #{tpu_custom_call.1} parent=1 // pred_check
      _
    $region3: #{tpu_custom_call.1} parent=1 // pred_check_branch
      %9 = sbr.rel (0) target = $region5
    $region4: #{tpu_custom_call.1} parent=1 // pred_region
      %s11 = ssub.s32 256, 256
      %12 = vsyncadd [#allocation4], %s11
      %s13 = sshll.u32 [#allocation3], 4
      %s14 = int_to_ptr.vmem [resolvable:$true] %s13
      %19 = dma.hbm_to_vmem [thread:$0]  %s0, 256, %s14, [#allocation4], 128, 128, 8
    $region5: #{tpu_custom_call.1} parent=1 // pred_fallthru
      _
    // Predicated region
    $region6: #{tpu_custom_call.1} parent=1 // pred_check
      _
    $region7: #{tpu_custom_call.1} parent=1 // pred_check_branch
      %21 = sbr.rel (0) target = $region9
    $region8: #{tpu_custom_call.1} parent=1 // pred_region
      %22 = dma.done [#allocation4], 256
    $region9: #{tpu_custom_call.1} parent=1 // pred_fallthru
      _
    %p23 = scmp.eq.s32.totalorder 0, 0
    // Predicated region
    $region10: #{tpu_custom_call.1} parent=1 // pred_check
      %p24 = pneg %p23
    $region11: #{tpu_custom_call.1} parent=1 // pred_check_branch
      %26 = sbr.rel (%p24) target = $region13
    $region12: #{tpu_custom_call.1} parent=1 // pred_region
      %vm27 = vcmask 25600
      %28 = vst.msk [vmem:[#allocation2] sm:$0x3] %vm27, 0.0
    $region13: #{tpu_custom_call.1} parent=1 // pred_fallthru
      _
    %v29 = vld [vmem:[#allocation2] sm:$0x3]
    %v30 = vld [vmem:[#allocation3] sm:$0xff]
    %v31 = vld [vmem:[#allocation3 + $0x8] sm:$0xff]
    %v34 = vcombine.high %v30, %v30
    %v35 = vcombine.high %v31, %v31
    %vm38 = vcmask 1043456
    %v39 = vsel %vm38, %v30, 0.0
    %v40 = vsel %vm38, %v34, 0.0
    %v41 = vadd.f32 %v39, %v40
    %42 = vadd.xlane.f32.xlu0 %v41
    %v43 = vpop.xlane.xlu0 %42
    %v44 = vsel %vm38, %v31, 0.0
    %v45 = vsel %vm38, %v35, 0.0
    %v46 = vadd.f32 %v44, %v45
    %47 = vadd.xlane.f32.xlu0 %v46
    %v48 = vpop.xlane.xlu0 %47
    %v51 = vlaneseq
    %v52 = vand.u32 %v51, 127
    %v53 = vlaneseq
    %v54 = vshrl.u32 %v53, 7
    %v55 = vsub.s32 %v52, %v54
    %v56 = vrot.slane %v43, %v55
    %v57 = vlaneseq
    %v58 = vshrl.u32 %v57, 7
    %v59 = vsub.s32 %v52, %v58
    %v60 = vrot.slane %v48, %v59
    %vm61 = vcmask 1041409
    %v62 = vsel %vm61, %v60, %v56
    %v64 = vadd.f32 %v29, %v62
    %vm65 = vcmask 25600
    %66 = vst.msk [vmem:[#allocation2] sm:$0x3] %vm65, %v64
    // Predicated region
    $region14: #{tpu_custom_call.1} parent=1 // pred_check
      %p67 = pneg %p23
    $region15: #{tpu_custom_call.1} parent=1 // pred_check_branch
      %69 = sbr.rel (%p67) target = $region17
    $region16: #{tpu_custom_call.1} parent=1 // pred_region
      %v70 = vld [vmem:[#allocation2] sm:$0x3]
      %v71 = vmul.f32 %v70, 0.00390625
      %72 = vst.msk [vmem:[#allocation6] sm:$0x3] %vm65, %v71
    $region17: #{tpu_custom_call.1} parent=1 // pred_fallthru
      _
    // Predicated region
    $region18: #{tpu_custom_call.1} parent=1 // pred_check
      _
    $region19: #{tpu_custom_call.1} parent=1 // pred_check_branch
      %74 = sbr.rel (0) target = $region21
    $region20: #{tpu_custom_call.1} parent=1 // pred_region
      %s76 = ssub.s32 32, 32
      %77 = vsyncadd [#allocation5], %s76
      %s79 = sshll.u32 [#allocation6], 4
      %s80 = int_to_ptr.vmem [resolvable:$true] %s79
      %82 = dma.vmem_to_hbm [thread:$0]  %s80, 32, %s1, [#allocation5]
    $region21: #{tpu_custom_call.1} parent=1 // pred_fallthru
      _
    // Predicated region
    $region22: #{tpu_custom_call.1} parent=1 // pred_check
      _
    $region23: #{tpu_custom_call.1} parent=1 // pred_check_branch
      %84 = sbr.rel (0) target = $region25
    $region24: #{tpu_custom_call.1} parent=1 // pred_region
      %85 = dma.done [#allocation5], 32
    $region25: #{tpu_custom_call.1} parent=1 // pred_fallthru
      _
    %86 = vsyncpa [#allocation4], 1
    %87 = vsyncpa [#allocation5], 1

</llo_original>
